<compile_context>
chip_gen: v6e
topology: v6e:2x2x1
jax: 0.10.0
libtpu: 0.0.40
codegen_flags: <defaults>
</compile_context>

<pallas_src>
import functools
import math

import jax
import jax.numpy as jnp
from jax import lax
from jax.experimental import pallas as pl
from jax.experimental.pallas import tpu as pltpu

EPS = 1e-5  # nn.InstanceNorm2d default


def _round_up(v, m):
    return (v + m - 1) // m * m


def _pick_tile_h(h, kkc, wp):
    """Largest divisor of H whose bf16 im2col staging chunk stays under ~4 MiB.

    TILE_H only sizes the in-kernel staging chunk (the grid is one step per sample),
    so the per-chunk overhead is tiny.  Prefer <= H//2 (multi-chunk path), but fall
    back to a single whole-H chunk for awkward (e.g. prime) H instead of collapsing
    to TILE_H == 1 (the old perf cliff).
    """
    budget = 4 * 1024 * 1024

    def stage_bytes(th):
        ws = _round_up(wp, 128 // math.gcd(th, 128))
        return kkc * th * ws * 2

    fits = [d for d in range(1, h + 1) if h % d == 0 and stage_bytes(d) <= budget]
    if not fits:
        return 1
    cap = max(h // 2, 8)
    capped = [d for d in fits if d <= cap]
    if capped and max(capped) >= 4:
        return max(capped)
    return max(fits)


def _conv_in_relu_kernel(x_ref, w_ref, b_ref, g_ref, be_ref, mask_ref, o_ref, stage_ref,
                         *, ksize, wstride, twp, num_chunks, c_in_pad, inv_count):
    """One sample: conv (fused-tap matmuls) -> InstanceNorm(affine) -> ReLU, in place."""
    c_out_pad = w_ref.shape[0]

    ssum = jnp.zeros((c_out_pad, 1), jnp.float32)
    ssq = jnp.zeros((c_out_pad, 1), jnp.float32)
    mask = mask_ref[...]            # (1, TWP): 1.0 for valid (col < W) columns
    bias = b_ref[...]               # (C_out_pad, 1) f32
    wmat = w_ref[...]               # (C_out_pad, K*K*C_in_pad) bf16

    # Static loop over row chunks.  Chunk bases (tc * TWP) are multiples of 128 lanes,
    # every slice / store below uses Python-int offsets.
    for tc in range(num_chunks):
        base = tc * twp
        # im2col staging: one static lane-offset slice of the flat padded input per tap.
        for ki in range(ksize):
            for kj in range(ksize):
                tap = ki * ksize + kj
                off = base + ki * wstride + kj
                stage_ref[tap * c_in_pad:(tap + 1) * c_in_pad, :] = (
                    x_ref[0, :, off:off + twp])
        # Single deep-contraction MXU matmul (K = K*K*C_in_pad) + bias, f32 accumulate.
        y = jnp.dot(wmat, stage_ref[...], preferred_element_type=jnp.float32) + bias
        o_ref[0, :, base:base + twp] = y                 # stays resident in VMEM (f32)
        ym = y * mask                                    # exclude junk columns from stats
        ssum = ssum + jnp.sum(ym, axis=-1, keepdims=True)
        ssq = ssq + jnp.sum(ym * y, axis=-1, keepdims=True)

    # InstanceNorm folded into a single scale/shift, then ReLU, applied in place.
    # TODO(synk): E[x^2]-E[x]^2 in f32 can lose precision for very large H*W; switch to
    #             mean-shifted / Welford accumulation if tighter parity is required.
    mean = ssum * inv_count
    var = jnp.maximum(ssq * inv_count - mean * mean, 0.0)
    scale = g_ref[...] * lax.rsqrt(var + EPS)
    shift = be_ref[...] - mean * scale
    for tc in range(num_chunks):
        base = tc * twp
        yc = o_ref[0, :, base:base + twp]
        o_ref[0, :, base:base + twp] = jnp.maximum(yc * scale + shift, 0.0)


@functools.partial(jax.jit, static_argnames=("kernel_size", "padding"))
def conv_block(x, weight, bias, gamma, beta, *, kernel_size=3, padding=1):
    """x: (N, C_in, H, W). weight: (C_out, C_in, K, K). Returns (N, C_out, H, W) f32."""
    N, C_in, H, W = x.shape
    C_out = weight.shape[0]
    K = kernel_size
    assert K % 2 == 1 and padding == K // 2, "only stride-1 'same' reflect conv supported"

    Hp, Wp = H + 2 * padding, W + 2 * padding
    C_in_pad = _round_up(C_in, 16)       # bf16 sublane packing for the staging block
    C_out_pad = _round_up(C_out, 8)      # f32 output / accumulator sublane granularity
    KKC = K * K * C_in_pad

    TILE_H = _pick_tile_h(H, KKC, Wp)
    num_chunks = H // TILE_H
    # Row stride padded so every chunk base (tc * TILE_H * WSTRIDE) is 128-lane aligned.
    WSTRIDE = _round_up(Wp, 128 // math.gcd(TILE_H, 128))
    TWP = TILE_H * WSTRIDE
    HWS = H * WSTRIDE
    LFLAT = _round_up(Hp * WSTRIDE + (K - 1), 128)   # tail pad keeps every tap in bounds

    # ---- host prep (no window/im2col materialization): pads + free flatten ----
    xb = x.astype(jnp.bfloat16)
    xp = jnp.pad(xb, ((0, 0), (0, 0), (padding, padding), (padding, padding)),
                 mode="reflect")
    xp = jnp.pad(xp, ((0, 0), (0, C_in_pad - C_in), (0, 0), (0, WSTRIDE - Wp)))
    xflat = xp.reshape(N, C_in_pad, Hp * WSTRIDE)
    xflat = jnp.pad(xflat, ((0, 0), (0, 0), (0, LFLAT - Hp * WSTRIDE)))

    # Fused conv weight: (C_out, C_in, K, K) -> (C_out_pad, K*K*C_in_pad), bf16.
    wt = weight.astype(jnp.float32).transpose(0, 2, 3, 1)          # (C_out, K, K, C_in)
    wt = jnp.pad(wt, ((0, C_out_pad - C_out), (0, 0), (0, 0), (0, C_in_pad - C_in)))
    wf = wt.reshape(C_out_pad, KKC).astype(jnp.bfloat16)

    b_r = jnp.pad(bias.astype(jnp.float32).reshape(C_out, 1),
                  ((0, C_out_pad - C_out), (0, 0)))
    g_r = jnp.pad(gamma.astype(jnp.float32).reshape(C_out, 1),
                  ((0, C_out_pad - C_out), (0, 0)))
    be_r = jnp.pad(beta.astype(jnp.float32).reshape(C_out, 1),
                   ((0, C_out_pad - C_out), (0, 0)))
    # 1.0 for valid output columns (col-in-row < W), 0.0 for WSTRIDE-W junk columns.
    mask = ((jnp.arange(TWP) % WSTRIDE) < W).astype(jnp.float32).reshape(1, TWP)

    out_p = pl.pallas_call(
        functools.partial(_conv_in_relu_kernel, ksize=K, wstride=WSTRIDE, twp=TWP,
                          num_chunks=num_chunks, c_in_pad=C_in_pad,
                          inv_count=1.0 / float(H * W)),
        out_shape=jax.ShapeDtypeStruct((N, C_out_pad, HWS), jnp.float32),
        grid_spec=pltpu.PrefetchScalarGridSpec(
            num_scalar_prefetch=0,
            grid=(N,),
            in_specs=[
                pl.BlockSpec((1, C_in_pad, LFLAT), lambda n: (n, 0, 0)),   # padded sample
                pl.BlockSpec((C_out_pad, KKC), lambda n: (0, 0)),          # fused weights
                pl.BlockSpec((C_out_pad, 1), lambda n: (0, 0)),            # bias
                pl.BlockSpec((C_out_pad, 1), lambda n: (0, 0)),            # gamma
                pl.BlockSpec((C_out_pad, 1), lambda n: (0, 0)),            # beta
                pl.BlockSpec((1, TWP), lambda n: (0, 0)),                  # column mask
            ],
            out_specs=pl.BlockSpec((1, C_out_pad, HWS), lambda n: (n, 0, 0)),
            scratch_shapes=[pltpu.VMEM((KKC, TWP), jnp.bfloat16)],         # im2col chunk
        ),
        compiler_params=pltpu.CompilerParams(
            dimension_semantics=("parallel",),
            vmem_limit_bytes=64 * 1024 * 1024,
        ),
    )(xflat, wf, b_r, g_r, be_r, mask)

    # NCHW result: the reshape is a free contiguous view-split; the final slice drops
    # the channel / column padding.
    # TODO(synk): emitting exact (H, W) blocks from the kernel would avoid this last
    #             copy but needs a lane->sublane relayout inside the kernel.
    return out_p.reshape(N, C_out_pad, H, WSTRIDE)[:, :C_out, :, :W]


def reference(x, weight, bias, gamma, beta, *, padding=1):
    """Pure-JAX reference: reflect-pad conv2d -> instance norm (affine) -> relu."""
    xp = jnp.pad(x, ((0, 0), (0, 0), (padding, padding), (padding, padding)),
                 mode="reflect")
    y = lax.conv_general_dilated(
        xp.astype(jnp.float32), weight.astype(jnp.float32),
        window_strides=(1, 1), padding="VALID",
        dimension_numbers=("NCHW", "OIHW", "NCHW"))
    y = y + bias.reshape(1, -1, 1, 1)
    mean = y.mean(axis=(2, 3), keepdims=True)
    var = ((y - mean) ** 2).mean(axis=(2, 3), keepdims=True)
    y = (y - mean) * lax.rsqrt(var + EPS)
    y = y * gamma.reshape(1, -1, 1, 1) + beta.reshape(1, -1, 1, 1)
    return jnp.maximum(y, 0.0)


if __name__ == "__main__":
    N, C_in, H, W = 2, 4, 16, 16
    C_out, K = 8, 3

    key = jax.random.PRNGKey(0)
    kx, kw, kb, kg, kbe = jax.random.split(key, 5)

    x = jax.random.normal(kx, (N, C_in, H, W), dtype=jnp.float32)
    fan_in = C_in * K * K
    bound = 1.0 / (fan_in ** 0.5)
    weight = jax.random.uniform(kw, (C_out, C_in, K, K), minval=-bound, maxval=bound,
                                dtype=jnp.float32)
    bias = jax.random.uniform(kb, (C_out,), minval=-bound, maxval=bound,
                              dtype=jnp.float32)
    gamma = jnp.ones((C_out,), jnp.float32) + 0.1 * jax.random.normal(kg, (C_out,))
    beta = 0.1 * jax.random.normal(kbe, (C_out,), dtype=jnp.float32)

    out = conv_block(x, weight, bias, gamma, beta, kernel_size=K, padding=1)
    out = jax.block_until_ready(out)

    ref = reference(x, weight, bias, gamma, beta, padding=1)
    assert out.shape == (N, C_out, H, W)
    # bf16 MXU operands; all accumulation, stats and the norm epilogue are f32.
    err = jnp.max(jnp.abs(out - ref))
    assert jnp.allclose(out, ref, atol=3e-2, rtol=3e-2), f"max abs err {err}"

    print("KERNEL_OK")
</pallas_src>

<mosaic_0001>
module attributes {stable_mosaic.version = 11 : i64} {
  func.func @_conv_in_relu_kernel(%arg0: i32, %arg1: memref<1x16x640xbf16, #tpu.memory_space<vmem>>, %arg2: memref<8x144xbf16, #tpu.memory_space<vmem>>, %arg3: memref<8x1xf32, #tpu.memory_space<vmem>>, %arg4: memref<8x1xf32, #tpu.memory_space<vmem>>, %arg5: memref<8x1xf32, #tpu.memory_space<vmem>>, %arg6: memref<1x256xf32, #tpu.memory_space<vmem>>, %arg7: memref<1x8x512xf32, #tpu.memory_space<vmem>>, %arg8: memref<144x256xbf16, #tpu.memory_space<vmem>>) attributes {dimension_semantics = [#tpu.dimension_semantics<parallel>], iteration_bounds = array<i64: 2>, scalar_prefetch = 0 : i64, scratch_operands = 1 : i64, tpu.core_type = #tpu.core_type<tc>, window_params = [{transform_indices = @transform_0, window_bounds = array<i64: 1, 16, 640>}, {pipeline_mode = #tpu.pipeline_mode<synchronous>, transform_indices = @transform_1, window_bounds = array<i64: 8, 144>}, {pipeline_mode = #tpu.pipeline_mode<synchronous>, transform_indices = @transform_2, window_bounds = array<i64: 8, 1>}, {pipeline_mode = #tpu.pipeline_mode<synchronous>, transform_indices = @transform_3, window_bounds = array<i64: 8, 1>}, {pipeline_mode = #tpu.pipeline_mode<synchronous>, transform_indices = @transform_4, window_bounds = array<i64: 8, 1>}, {pipeline_mode = #tpu.pipeline_mode<synchronous>, transform_indices = @transform_5, window_bounds = array<i64: 1, 256>}, {transform_indices = @transform_6, window_bounds = array<i64: 1, 8, 512>}]} {
    %cst = arith.constant 0.000000e+00 : f32
    %0 = vector.broadcast %cst : f32 to vector<8x1xf32>
    %cst_0 = arith.constant 0.000000e+00 : f32
    %1 = vector.broadcast %cst_0 : f32 to vector<8x1xf32>
    %c0 = arith.constant 0 : index
    %c0_1 = arith.constant 0 : index
    %2 = vector.load %arg6[%c0, %c0_1] : memref<1x256xf32, #tpu.memory_space<vmem>>, vector<1x256xf32>
    %c0_2 = arith.constant 0 : index
    %c0_3 = arith.constant 0 : index
    %3 = vector.load %arg3[%c0_2, %c0_3] : memref<8x1xf32, #tpu.memory_space<vmem>>, vector<8x1xf32>
    %c0_4 = arith.constant 0 : index
    %c0_5 = arith.constant 0 : index
    %4 = vector.load %arg2[%c0_4, %c0_5] : memref<8x144xbf16, #tpu.memory_space<vmem>>, vector<8x144xbf16>
    %c0_6 = arith.constant 0 : index
    %c0_7 = arith.constant 0 : index
    %c0_8 = arith.constant 0 : index
    %5 = vector.load %arg1[%c0_6, %c0_7, %c0_8] : memref<1x16x640xbf16, #tpu.memory_space<vmem>>, vector<1x16x256xbf16>
    %6 = vector.shape_cast %5 : vector<1x16x256xbf16> to vector<16x256xbf16>
    %c0_9 = arith.constant 0 : index
    %c0_10 = arith.constant 0 : index
    %7 = vector.load %arg8[%c0_9, %c0_10] : memref<144x256xbf16, #tpu.memory_space<vmem>>, vector<16x256xbf16>
    tpu.vector_store %arg8[%c0_9, %c0_10], %6 {strides = array<i32>} : memref<144x256xbf16, #tpu.memory_space<vmem>>, vector<16x256xbf16>,
    %c0_11 = arith.constant 0 : index
    %c0_12 = arith.constant 0 : index
    %c1 = arith.constant 1 : index
    %8 = vector.load %arg1[%c0_11, %c0_12, %c1] : memref<1x16x640xbf16, #tpu.memory_space<vmem>>, vector<1x16x256xbf16>
    %9 = vector.shape_cast %8 : vector<1x16x256xbf16> to vector<16x256xbf16>
    %c16 = arith.constant 16 : index
    %c0_13 = arith.constant 0 : index
    %10 = vector.load %arg8[%c16, %c0_13] : memref<144x256xbf16, #tpu.memory_space<vmem>>, vector<16x256xbf16>
    tpu.vector_store %arg8[%c16, %c0_13], %9 {strides = array<i32>} : memref<144x256xbf16, #tpu.memory_space<vmem>>, vector<16x256xbf16>,
    %c0_14 = arith.constant 0 : index
    %c0_15 = arith.constant 0 : index
    %c2 = arith.constant 2 : index
    %11 = vector.load %arg1[%c0_14, %c0_15, %c2] : memref<1x16x640xbf16, #tpu.memory_space<vmem>>, vector<1x16x256xbf16>
    %12 = vector.shape_cast %11 : vector<1x16x256xbf16> to vector<16x256xbf16>
    %c32 = arith.constant 32 : index
    %c0_16 = arith.constant 0 : index
    %13 = vector.load %arg8[%c32, %c0_16] : memref<144x256xbf16, #tpu.memory_space<vmem>>, vector<16x256xbf16>
    tpu.vector_store %arg8[%c32, %c0_16], %12 {strides = array<i32>} : memref<144x256xbf16, #tpu.memory_space<vmem>>, vector<16x256xbf16>,
    %c0_17 = arith.constant 0 : index
    %c0_18 = arith.constant 0 : index
    %c32_19 = arith.constant 32 : index
    %14 = vector.load %arg1[%c0_17, %c0_18, %c32_19] : memref<1x16x640xbf16, #tpu.memory_space<vmem>>, vector<1x16x256xbf16>
    %15 = vector.shape_cast %14 : vector<1x16x256xbf16> to vector<16x256xbf16>
    %c48 = arith.constant 48 : index
    %c0_20 = arith.constant 0 : index
    %16 = vector.load %arg8[%c48, %c0_20] : memref<144x256xbf16, #tpu.memory_space<vmem>>, vector<16x256xbf16>
    tpu.vector_store %arg8[%c48, %c0_20], %15 {strides = array<i32>} : memref<144x256xbf16, #tpu.memory_space<vmem>>, vector<16x256xbf16>,
    %c0_21 = arith.constant 0 : index
    %c0_22 = arith.constant 0 : index
    %c33 = arith.constant 33 : index
    %17 = vector.load %arg1[%c0_21, %c0_22, %c33] : memref<1x16x640xbf16, #tpu.memory_space<vmem>>, vector<1x16x256xbf16>
    %18 = vector.shape_cast %17 : vector<1x16x256xbf16> to vector<16x256xbf16>
    %c64 = arith.constant 64 : index
    %c0_23 = arith.constant 0 : index
    %19 = vector.load %arg8[%c64, %c0_23] : memref<144x256xbf16, #tpu.memory_space<vmem>>, vector<16x256xbf16>
    tpu.vector_store %arg8[%c64, %c0_23], %18 {strides = array<i32>} : memref<144x256xbf16, #tpu.memory_space<vmem>>, vector<16x256xbf16>,
    %c0_24 = arith.constant 0 : index
    %c0_25 = arith.constant 0 : index
    %c34 = arith.constant 34 : index
    %20 = vector.load %arg1[%c0_24, %c0_25, %c34] : memref<1x16x640xbf16, #tpu.memory_space<vmem>>, vector<1x16x256xbf16>
    %21 = vector.shape_cast %20 : vector<1x16x256xbf16> to vector<16x256xbf16>
    %c80 = arith.constant 80 : index
    %c0_26 = arith.constant 0 : index
    %22 = vector.load %arg8[%c80, %c0_26] : memref<144x256xbf16, #tpu.memory_space<vmem>>, vector<16x256xbf16>
    tpu.vector_store %arg8[%c80, %c0_26], %21 {strides = array<i32>} : memref<144x256xbf16, #tpu.memory_space<vmem>>, vector<16x256xbf16>,
    %c0_27 = arith.constant 0 : index
    %c0_28 = arith.constant 0 : index
    %c64_29 = arith.constant 64 : index
    %23 = vector.load %arg1[%c0_27, %c0_28, %c64_29] : memref<1x16x640xbf16, #tpu.memory_space<vmem>>, vector<1x16x256xbf16>
    %24 = vector.shape_cast %23 : vector<1x16x256xbf16> to vector<16x256xbf16>
    %c96 = arith.constant 96 : index
    %c0_30 = arith.constant 0 : index
    %25 = vector.load %arg8[%c96, %c0_30] : memref<144x256xbf16, #tpu.memory_space<vmem>>, vector<16x256xbf16>
    tpu.vector_store %arg8[%c96, %c0_30], %24 {strides = array<i32>} : memref<144x256xbf16, #tpu.memory_space<vmem>>, vector<16x256xbf16>,
    %c0_31 = arith.constant 0 : index
    %c0_32 = arith.constant 0 : index
    %c65 = arith.constant 65 : index
    %26 = vector.load %arg1[%c0_31, %c0_32, %c65] : memref<1x16x640xbf16, #tpu.memory_space<vmem>>, vector<1x16x256xbf16>
    %27 = vector.shape_cast %26 : vector<1x16x256xbf16> to vector<16x256xbf16>
    %c112 = arith.constant 112 : index
    %c0_33 = arith.constant 0 : index
    %28 = vector.load %arg8[%c112, %c0_33] : memref<144x256xbf16, #tpu.memory_space<vmem>>, vector<16x256xbf16>
    tpu.vector_store %arg8[%c112, %c0_33], %27 {strides = array<i32>} : memref<144x256xbf16, #tpu.memory_space<vmem>>, vector<16x256xbf16>,
    %c0_34 = arith.constant 0 : index
    %c0_35 = arith.constant 0 : index
    %c66 = arith.constant 66 : index
    %29 = vector.load %arg1[%c0_34, %c0_35, %c66] : memref<1x16x640xbf16, #tpu.memory_space<vmem>>, vector<1x16x256xbf16>
    %30 = vector.shape_cast %29 : vector<1x16x256xbf16> to vector<16x256xbf16>
    %c128 = arith.constant 128 : index
    %c0_36 = arith.constant 0 : index
    %31 = vector.load %arg8[%c128, %c0_36] : memref<144x256xbf16, #tpu.memory_space<vmem>>, vector<16x256xbf16>
    tpu.vector_store %arg8[%c128, %c0_36], %30 {strides = array<i32>} : memref<144x256xbf16, #tpu.memory_space<vmem>>, vector<16x256xbf16>,
    %c0_37 = arith.constant 0 : index
    %c0_38 = arith.constant 0 : index
    %32 = vector.load %arg8[%c0_37, %c0_38] : memref<144x256xbf16, #tpu.memory_space<vmem>>, vector<144x256xbf16>
    %cst_39 = arith.constant dense<0.000000e+00> : vector<8x256xf32>
    %33 = tpu.matmul %4, %32, %cst_39 {dimension_numbers = #tpu.dot_dimension_numbers<[1], [0], [0], [1], [0, 0, 1, 1], [], []>} : vector<8x144xbf16>, vector<144x256xbf16>, vector<8x256xf32> -> vector<8x256xf32>
    %34 = vector.broadcast %3 : vector<8x1xf32> to vector<8x256xf32>
    %35 = arith.addf %33, %34 : vector<8x256xf32>
    %c0_40 = arith.constant 0 : index
    %c0_41 = arith.constant 0 : index
    %c0_42 = arith.constant 0 : index
    %36 = vector.load %arg7[%c0_40, %c0_41, %c0_42] : memref<1x8x512xf32, #tpu.memory_space<vmem>>, vector<1x8x256xf32>
    %37 = vector.shape_cast %36 : vector<1x8x256xf32> to vector<8x256xf32>
    %38 = vector.shape_cast %35 : vector<8x256xf32> to vector<1x8x256xf32>
    tpu.vector_store %arg7[%c0_40, %c0_41, %c0_42], %38 {strides = array<i32>} : memref<1x8x512xf32, #tpu.memory_space<vmem>>, vector<1x8x256xf32>,
    %39 = vector.broadcast %2 : vector<1x256xf32> to vector<8x256xf32>
    %40 = arith.mulf %35, %39 : vector<8x256xf32>
    %cst_43 = arith.constant dense<0.000000e+00> : vector<8xf32>
    %41 = vector.multi_reduction <add>, %40, %cst_43 [1] : vector<8x256xf32> to vector<8xf32>
    %42 = vector.shape_cast %41 : vector<8xf32> to vector<8x1xf32>
    %43 = arith.addf %0, %42 : vector<8x1xf32>
    %44 = arith.mulf %40, %35 : vector<8x256xf32>
    %cst_44 = arith.constant dense<0.000000e+00> : vector<8xf32>
    %45 = vector.multi_reduction <add>, %44, %cst_44 [1] : vector<8x256xf32> to vector<8xf32>
    %46 = vector.shape_cast %45 : vector<8xf32> to vector<8x1xf32>
    %47 = arith.addf %1, %46 : vector<8x1xf32>
    %c0_45 = arith.constant 0 : index
    %c0_46 = arith.constant 0 : index
    %c256 = arith.constant 256 : index
    %48 = vector.load %arg1[%c0_45, %c0_46, %c256] : memref<1x16x640xbf16, #tpu.memory_space<vmem>>, vector<1x16x256xbf16>
    %49 = vector.shape_cast %48 : vector<1x16x256xbf16> to vector<16x256xbf16>
    %c0_47 = arith.constant 0 : index
    %c0_48 = arith.constant 0 : index
    %50 = vector.load %arg8[%c0_47, %c0_48] : memref<144x256xbf16, #tpu.memory_space<vmem>>, vector<16x256xbf16>
    tpu.vector_store %arg8[%c0_47, %c0_48], %49 {strides = array<i32>} : memref<144x256xbf16, #tpu.memory_space<vmem>>, vector<16x256xbf16>,
    %c0_49 = arith.constant 0 : index
    %c0_50 = arith.constant 0 : index
    %c257 = arith.constant 257 : index
    %51 = vector.load %arg1[%c0_49, %c0_50, %c257] : memref<1x16x640xbf16, #tpu.memory_space<vmem>>, vector<1x16x256xbf16>
    %52 = vector.shape_cast %51 : vector<1x16x256xbf16> to vector<16x256xbf16>
    %c16_51 = arith.constant 16 : index
    %c0_52 = arith.constant 0 : index
    %53 = vector.load %arg8[%c16_51, %c0_52] : memref<144x256xbf16, #tpu.memory_space<vmem>>, vector<16x256xbf16>
    tpu.vector_store %arg8[%c16_51, %c0_52], %52 {strides = array<i32>} : memref<144x256xbf16, #tpu.memory_space<vmem>>, vector<16x256xbf16>,
    %c0_53 = arith.constant 0 : index
    %c0_54 = arith.constant 0 : index
    %c258 = arith.constant 258 : index
    %54 = vector.load %arg1[%c0_53, %c0_54, %c258] : memref<1x16x640xbf16, #tpu.memory_space<vmem>>, vector<1x16x256xbf16>
    %55 = vector.shape_cast %54 : vector<1x16x256xbf16> to vector<16x256xbf16>
    %c32_55 = arith.constant 32 : index
    %c0_56 = arith.constant 0 : index
    %56 = vector.load %arg8[%c32_55, %c0_56] : memref<144x256xbf16, #tpu.memory_space<vmem>>, vector<16x256xbf16>
    tpu.vector_store %arg8[%c32_55, %c0_56], %55 {strides = array<i32>} : memref<144x256xbf16, #tpu.memory_space<vmem>>, vector<16x256xbf16>,
    %c0_57 = arith.constant 0 : index
    %c0_58 = arith.constant 0 : index
    %c288 = arith.constant 288 : index
    %57 = vector.load %arg1[%c0_57, %c0_58, %c288] : memref<1x16x640xbf16, #tpu.memory_space<vmem>>, vector<1x16x256xbf16>
    %58 = vector.shape_cast %57 : vector<1x16x256xbf16> to vector<16x256xbf16>
    %c48_59 = arith.constant 48 : index
    %c0_60 = arith.constant 0 : index
    %59 = vector.load %arg8[%c48_59, %c0_60] : memref<144x256xbf16, #tpu.memory_space<vmem>>, vector<16x256xbf16>
    tpu.vector_store %arg8[%c48_59, %c0_60], %58 {strides = array<i32>} : memref<144x256xbf16, #tpu.memory_space<vmem>>, vector<16x256xbf16>,
    %c0_61 = arith.constant 0 : index
    %c0_62 = arith.constant 0 : index
    %c289 = arith.constant 289 : index
    %60 = vector.load %arg1[%c0_61, %c0_62, %c289] : memref<1x16x640xbf16, #tpu.memory_space<vmem>>, vector<1x16x256xbf16>
    %61 = vector.shape_cast %60 : vector<1x16x256xbf16> to vector<16x256xbf16>
    %c64_63 = arith.constant 64 : index
    %c0_64 = arith.constant 0 : index
    %62 = vector.load %arg8[%c64_63, %c0_64] : memref<144x256xbf16, #tpu.memory_space<vmem>>, vector<16x256xbf16>
    tpu.vector_store %arg8[%c64_63, %c0_64], %61 {strides = array<i32>} : memref<144x256xbf16, #tpu.memory_space<vmem>>, vector<16x256xbf16>,
    %c0_65 = arith.constant 0 : index
    %c0_66 = arith.constant 0 : index
    %c290 = arith.constant 290 : index
    %63 = vector.load %arg1[%c0_65, %c0_66, %c290] : memref<1x16x640xbf16, #tpu.memory_space<vmem>>, vector<1x16x256xbf16>
    %64 = vector.shape_cast %63 : vector<1x16x256xbf16> to vector<16x256xbf16>
    %c80_67 = arith.constant 80 : index
    %c0_68 = arith.constant 0 : index
    %65 = vector.load %arg8[%c80_67, %c0_68] : memref<144x256xbf16, #tpu.memory_space<vmem>>, vector<16x256xbf16>
    tpu.vector_store %arg8[%c80_67, %c0_68], %64 {strides = array<i32>} : memref<144x256xbf16, #tpu.memory_space<vmem>>, vector<16x256xbf16>,
    %c0_69 = arith.constant 0 : index
    %c0_70 = arith.constant 0 : index
    %c320 = arith.constant 320 : index
    %66 = vector.load %arg1[%c0_69, %c0_70, %c320] : memref<1x16x640xbf16, #tpu.memory_space<vmem>>, vector<1x16x256xbf16>
    %67 = vector.shape_cast %66 : vector<1x16x256xbf16> to vector<16x256xbf16>
    %c96_71 = arith.constant 96 : index
    %c0_72 = arith.constant 0 : index
    %68 = vector.load %arg8[%c96_71, %c0_72] : memref<144x256xbf16, #tpu.memory_space<vmem>>, vector<16x256xbf16>
    tpu.vector_store %arg8[%c96_71, %c0_72], %67 {strides = array<i32>} : memref<144x256xbf16, #tpu.memory_space<vmem>>, vector<16x256xbf16>,
    %c0_73 = arith.constant 0 : index
    %c0_74 = arith.constant 0 : index
    %c321 = arith.constant 321 : index
    %69 = vector.load %arg1[%c0_73, %c0_74, %c321] : memref<1x16x640xbf16, #tpu.memory_space<vmem>>, vector<1x16x256xbf16>
    %70 = vector.shape_cast %69 : vector<1x16x256xbf16> to vector<16x256xbf16>
    %c112_75 = arith.constant 112 : index
    %c0_76 = arith.constant 0 : index
    %71 = vector.load %arg8[%c112_75, %c0_76] : memref<144x256xbf16, #tpu.memory_space<vmem>>, vector<16x256xbf16>
    tpu.vector_store %arg8[%c112_75, %c0_76], %70 {strides = array<i32>} : memref<144x256xbf16, #tpu.memory_space<vmem>>, vector<16x256xbf16>,
    %c0_77 = arith.constant 0 : index
    %c0_78 = arith.constant 0 : index
    %c322 = arith.constant 322 : index
    %72 = vector.load %arg1[%c0_77, %c0_78, %c322] : memref<1x16x640xbf16, #tpu.memory_space<vmem>>, vector<1x16x256xbf16>
    %73 = vector.shape_cast %72 : vector<1x16x256xbf16> to vector<16x256xbf16>
    %c128_79 = arith.constant 128 : index
    %c0_80 = arith.constant 0 : index
    %74 = vector.load %arg8[%c128_79, %c0_80] : memref<144x256xbf16, #tpu.memory_space<vmem>>, vector<16x256xbf16>
    tpu.vector_store %arg8[%c128_79, %c0_80], %73 {strides = array<i32>} : memref<144x256xbf16, #tpu.memory_space<vmem>>, vector<16x256xbf16>,
    %c0_81 = arith.constant 0 : index
    %c0_82 = arith.constant 0 : index
    %75 = vector.load %arg8[%c0_81, %c0_82] : memref<144x256xbf16, #tpu.memory_space<vmem>>, vector<144x256xbf16>
    %cst_83 = arith.constant dense<0.000000e+00> : vector<8x256xf32>
    %76 = tpu.matmul %4, %75, %cst_83 {dimension_numbers = #tpu.dot_dimension_numbers<[1], [0], [0], [1], [0, 0, 1, 1], [], []>} : vector<8x144xbf16>, vector<144x256xbf16>, vector<8x256xf32> -> vector<8x256xf32>
    %77 = vector.broadcast %3 : vector<8x1xf32> to vector<8x256xf32>
    %78 = arith.addf %76, %77 : vector<8x256xf32>
    %c0_84 = arith.constant 0 : index
    %c0_85 = arith.constant 0 : index
    %c256_86 = arith.constant 256 : index
    %79 = vector.load %arg7[%c0_84, %c0_85, %c256_86] : memref<1x8x512xf32, #tpu.memory_space<vmem>>, vector<1x8x256xf32>
    %80 = vector.shape_cast %79 : vector<1x8x256xf32> to vector<8x256xf32>
    %81 = vector.shape_cast %78 : vector<8x256xf32> to vector<1x8x256xf32>
    tpu.vector_store %arg7[%c0_84, %c0_85, %c256_86], %81 {strides = array<i32>} : memref<1x8x512xf32, #tpu.memory_space<vmem>>, vector<1x8x256xf32>,
    %82 = vector.broadcast %2 : vector<1x256xf32> to vector<8x256xf32>
    %83 = arith.mulf %78, %82 : vector<8x256xf32>
    %cst_87 = arith.constant dense<0.000000e+00> : vector<8xf32>
    %84 = vector.multi_reduction <add>, %83, %cst_87 [1] : vector<8x256xf32> to vector<8xf32>
    %85 = vector.shape_cast %84 : vector<8xf32> to vector<8x1xf32>
    %86 = arith.addf %43, %85 : vector<8x1xf32>
    %87 = arith.mulf %83, %78 : vector<8x256xf32>
    %cst_88 = arith.constant dense<0.000000e+00> : vector<8xf32>
    %88 = vector.multi_reduction <add>, %87, %cst_88 [1] : vector<8x256xf32> to vector<8xf32>
    %89 = vector.shape_cast %88 : vector<8xf32> to vector<8x1xf32>
    %90 = arith.addf %47, %89 : vector<8x1xf32>
    %cst_89 = arith.constant 3.906250e-03 : f32
    %91 = vector.broadcast %cst_89 : f32 to vector<8x1xf32>
    %92 = arith.mulf %86, %91 : vector<8x1xf32>
    %cst_90 = arith.constant 3.906250e-03 : f32
    %93 = vector.broadcast %cst_90 : f32 to vector<8x1xf32>
    %94 = arith.mulf %90, %93 : vector<8x1xf32>
    %95 = arith.mulf %92, %92 : vector<8x1xf32>
    %96 = arith.subf %94, %95 : vector<8x1xf32>
    %cst_91 = arith.constant 0.000000e+00 : f32
    %97 = vector.broadcast %cst_91 : f32 to vector<8x1xf32>
    %98 = arith.maximumf %96, %97 : vector<8x1xf32>
    %c0_92 = arith.constant 0 : index
    %c0_93 = arith.constant 0 : index
    %99 = vector.load %arg4[%c0_92, %c0_93] : memref<8x1xf32, #tpu.memory_space<vmem>>, vector<8x1xf32>
    %cst_94 = arith.constant 9.99999974E-6 : f32
    %100 = vector.broadcast %cst_94 : f32 to vector<8x1xf32>
    %101 = arith.addf %98, %100 : vector<8x1xf32>
    %102 = math.rsqrt %101 : vector<8x1xf32>
    %103 = arith.mulf %99, %102 : vector<8x1xf32>
    %c0_95 = arith.constant 0 : index
    %c0_96 = arith.constant 0 : index
    %104 = vector.load %arg5[%c0_95, %c0_96] : memref<8x1xf32, #tpu.memory_space<vmem>>, vector<8x1xf32>
    %105 = arith.mulf %92, %103 : vector<8x1xf32>
    %106 = arith.subf %104, %105 : vector<8x1xf32>
    %c0_97 = arith.constant 0 : index
    %c0_98 = arith.constant 0 : index
    %c0_99 = arith.constant 0 : index
    %107 = vector.load %arg7[%c0_97, %c0_98, %c0_99] : memref<1x8x512xf32, #tpu.memory_space<vmem>>, vector<1x8x256xf32>
    %108 = vector.shape_cast %107 : vector<1x8x256xf32> to vector<8x256xf32>
    %109 = vector.broadcast %103 : vector<8x1xf32> to vector<8x256xf32>
    %110 = arith.mulf %108, %109 : vector<8x256xf32>
    %111 = vector.broadcast %106 : vector<8x1xf32> to vector<8x256xf32>
    %112 = arith.addf %110, %111 : vector<8x256xf32>
    %cst_100 = arith.constant 0.000000e+00 : f32
    %113 = vector.broadcast %cst_100 : f32 to vector<8x256xf32>
    %114 = arith.maximumf %112, %113 : vector<8x256xf32>
    %c0_101 = arith.constant 0 : index
    %c0_102 = arith.constant 0 : index
    %c0_103 = arith.constant 0 : index
    %115 = vector.load %arg7[%c0_101, %c0_102, %c0_103] : memref<1x8x512xf32, #tpu.memory_space<vmem>>, vector<1x8x256xf32>
    %116 = vector.shape_cast %115 : vector<1x8x256xf32> to vector<8x256xf32>
    %117 = vector.shape_cast %114 : vector<8x256xf32> to vector<1x8x256xf32>
    tpu.vector_store %arg7[%c0_101, %c0_102, %c0_103], %117 {strides = array<i32>} : memref<1x8x512xf32, #tpu.memory_space<vmem>>, vector<1x8x256xf32>,
    %c0_104 = arith.constant 0 : index
    %c0_105 = arith.constant 0 : index
    %c256_106 = arith.constant 256 : index
    %118 = vector.load %arg7[%c0_104, %c0_105, %c256_106] : memref<1x8x512xf32, #tpu.memory_space<vmem>>, vector<1x8x256xf32>
    %119 = vector.shape_cast %118 : vector<1x8x256xf32> to vector<8x256xf32>
    %120 = vector.broadcast %103 : vector<8x1xf32> to vector<8x256xf32>
    %121 = arith.mulf %119, %120 : vector<8x256xf32>
    %122 = vector.broadcast %106 : vector<8x1xf32> to vector<8x256xf32>
    %123 = arith.addf %121, %122 : vector<8x256xf32>
    %cst_107 = arith.constant 0.000000e+00 : f32
    %124 = vector.broadcast %cst_107 : f32 to vector<8x256xf32>
    %125 = arith.maximumf %123, %124 : vector<8x256xf32>
    %c0_108 = arith.constant 0 : index
    %c0_109 = arith.constant 0 : index
    %c256_110 = arith.constant 256 : index
    %126 = vector.load %arg7[%c0_108, %c0_109, %c256_110] : memref<1x8x512xf32, #tpu.memory_space<vmem>>, vector<1x8x256xf32>
    %127 = vector.shape_cast %126 : vector<1x8x256xf32> to vector<8x256xf32>
    %128 = vector.shape_cast %125 : vector<8x256xf32> to vector<1x8x256xf32>
    tpu.vector_store %arg7[%c0_108, %c0_109, %c256_110], %128 {strides = array<i32>} : memref<1x8x512xf32, #tpu.memory_space<vmem>>, vector<1x8x256xf32>,
    return
  }
  func.func @transform_0(%arg0: i32) -> (i32, i32, i32) {
    %c0_i32 = arith.constant 0 : i32
    %c0_i32_0 = arith.constant 0 : i32
    %c0_i32_1 = arith.constant 0 : i32
    return %arg0, %c0_i32, %c0_i32_0 : i32, i32, i32
  }
  func.func @transform_1(%arg0: i32) -> (i32, i32) {
    %c0_i32 = arith.constant 0 : i32
    %c0_i32_0 = arith.constant 0 : i32
    %c0_i32_1 = arith.constant 0 : i32
    return %c0_i32, %c0_i32_0 : i32, i32
  }
  func.func @transform_2(%arg0: i32) -> (i32, i32) {
    %c0_i32 = arith.constant 0 : i32
    %c0_i32_0 = arith.constant 0 : i32
    %c0_i32_1 = arith.constant 0 : i32
    return %c0_i32, %c0_i32_0 : i32, i32
  }
  func.func @transform_3(%arg0: i32) -> (i32, i32) {
    %c0_i32 = arith.constant 0 : i32
    %c0_i32_0 = arith.constant 0 : i32
    %c0_i32_1 = arith.constant 0 : i32
    return %c0_i32, %c0_i32_0 : i32, i32
  }
  func.func @transform_4(%arg0: i32) -> (i32, i32) {
    %c0_i32 = arith.constant 0 : i32
    %c0_i32_0 = arith.constant 0 : i32
    %c0_i32_1 = arith.constant 0 : i32
    return %c0_i32, %c0_i32_0 : i32, i32
  }
  func.func @transform_5(%arg0: i32) -> (i32, i32) {
    %c0_i32 = arith.constant 0 : i32
    %c0_i32_0 = arith.constant 0 : i32
    %c0_i32_1 = arith.constant 0 : i32
    return %c0_i32, %c0_i32_0 : i32, i32
  }
  func.func @transform_6(%arg0: i32) -> (i32, i32, i32) {
    %c0_i32 = arith.constant 0 : i32
    %c0_i32_0 = arith.constant 0 : i32
    %c0_i32_1 = arith.constant 0 : i32
    return %arg0, %c0_i32, %c0_i32_0 : i32, i32, i32
  }
}

</mosaic_0001>

<llo_original>
// kernel: conv_block.1
$region0: #{conv_block.1}
  #allocation0 [shape = 'u32[]', space=smem, size = 0x4, offset = 0x4, fixed_abs, tag = 'smem constant byte address 0x4 - core index']
  #allocation1 [shape = 'u32[144,128]{1,0:T(1,128)}', space=vmem, size = 0x12000, scoped, tag = 'internal scratch']
  #allocation2 [shape = 'bf16[144,256]{1,0:T(8,128)(2,1)}', space=vmem, size = 0x12000, scoped, tag = 'scratch operand']
  %s0 = inlined_call_operand.vmem [shape: bf16[2,16,640], index: 0, kind: input, shape index: {}]
  %s1 = inlined_call_operand.vmem [shape: bf16[8,144], index: 1, kind: input, shape index: {}]
  %s2 = inlined_call_operand.vmem [shape: f32[8,1], index: 2, kind: input, shape index: {}]
  %s3 = inlined_call_operand.vmem [shape: f32[8,1], index: 3, kind: input, shape index: {}]
  %s4 = inlined_call_operand.vmem [shape: f32[8,1], index: 4, kind: input, shape index: {}]
  %s5 = inlined_call_operand.vmem [shape: f32[1,256], index: 5, kind: input, shape index: {}]
  %s6 = inlined_call_operand.vmem [shape: f32[2,8,512], index: 6, kind: output, shape index: {}]
  %s7 = sld [smem:[#allocation0]]
  $region57: #{conv_block.1} parent=0
    _
  %s9 = ssub.s32 1, %s7
  %s10 = scalar_select 0, %s9, %s7
  loop: start=0, step=1, limit=4
  $region2: #{conv_block.1} parent=0 // loop_pre_header
    _
  $region3: #{conv_block.1} parent=0 // loop_header
    %s12 = sphi 0, %s16
    %p13 = scmp.ge.s32.totalorder %s12, 4
    %s22 = sphi 0, %s24
    %s25 = sphi 0, %s22
    %s26 = sphi 0, %s25
    %s42 = sphi 0, %s26
    %s46 = sphi 0, %s46
    %s48 = sphi 0, %s46
    %s49 = sphi 0, %s48
    %s63 = sphi 0, %s49
    %s67 = sphi 0, %s67
    %s69 = sphi 0, %s67
    %s70 = sphi 0, %s69
    %s84 = sphi 0, %s70
    %s88 = sphi 0, %s88
    %s90 = sphi 0, %s88
    %s91 = sphi 0, %s90
    %s105 = sphi 0, %s91
    %s109 = sphi 0, %s109
    %s111 = sphi 0, %s109
    %s112 = sphi 0, %s111
    %s126 = sphi 0, %s112
    %s130 = sphi 0, %s130
    %s132 = sphi 0, %s130
    %s133 = sphi 0, %s132
    %s147 = sphi 0, %s133
    %s153 = sphi 0, %s155
    %s156 = sphi 0, %s153
    %s157 = sphi 0, %s156
    %s173 = sphi 0, %s157
  $region4: #{conv_block.1} parent=0 // loop_header_branch
    %15 = sbr.rel (%p13) target = $region8
  $region5: #{conv_block.1} parent=0 // loop_body
    %s17 = ssub.s32 %s12, 1
    %s18 = ssub.s32 %s12, 2
    %s19 = sadd.s32 %s12, 1
    %s20 = ssub.s32 %s12, %s19
    %p21 = scmp.eq.s32.totalorder %s20, 0
    %s23 = sadd.s32 %s22, 1
    %s24 = scalar_select %p21, %s22, %s23
    %p27 = pneg %p21
    %p28 = scmp.eq.s32.totalorder %s12, 1
    %p29 = por %p27, %p28
    %p30 = scmp.ne.s32.totalorder %s22, %s25
    %p31 = scmp.eq.s32.totalorder %s12, 0
    %p32 = por %p30, %p31
    %p33 = scmp.ne.s32.totalorder %s22, %s25
    %p34 = scmp.eq.s32.totalorder %s17, 1
    %p35 = por %p33, %p34
    %p36 = scmp.ne.s32.totalorder %s25, %s26
    %p37 = scmp.eq.s32.totalorder %s17, 0
    %p38 = por %p36, %p37
    %p39 = scmp.ne.s32.totalorder %s25, %s26
    %p40 = scmp.eq.s32.totalorder %s18, 1
    %p41 = por %p39, %p40
    %p43 = scmp.ne.s32.totalorder %s26, %s42
    %p44 = scmp.eq.s32.totalorder %s18, 0
    %p45 = por %p43, %p44
    %s47 = sadd.s32 %s46, 1
    %p50 = scmp.eq.s32.totalorder %s12, 1
    %p51 = scmp.ne.s32.totalorder %s46, %s48
    %p52 = scmp.eq.s32.totalorder %s12, 0
    %p53 = por %p51, %p52
    %p54 = scmp.ne.s32.totalorder %s46, %s48
    %p55 = scmp.eq.s32.totalorder %s17, 1
    %p56 = por %p54, %p55
    %p57 = scmp.ne.s32.totalorder %s48, %s49
    %p58 = scmp.eq.s32.totalorder %s17, 0
    %p59 = por %p57, %p58
    %p60 = scmp.ne.s32.totalorder %s48, %s49
    %p61 = scmp.eq.s32.totalorder %s18, 1
    %p62 = por %p60, %p61
    %p64 = scmp.ne.s32.totalorder %s49, %s63
    %p65 = scmp.eq.s32.totalorder %s18, 0
    %p66 = por %p64, %p65
    %s68 = sadd.s32 %s67, 1
    %p71 = scmp.eq.s32.totalorder %s12, 1
    %p72 = scmp.ne.s32.totalorder %s67, %s69
    %p73 = scmp.eq.s32.totalorder %s12, 0
    %p74 = por %p72, %p73
    %p75 = scmp.ne.s32.totalorder %s67, %s69
    %p76 = scmp.eq.s32.totalorder %s17, 1
    %p77 = por %p75, %p76
    %p78 = scmp.ne.s32.totalorder %s69, %s70
    %p79 = scmp.eq.s32.totalorder %s17, 0
    %p80 = por %p78, %p79
    %p81 = scmp.ne.s32.totalorder %s69, %s70
    %p82 = scmp.eq.s32.totalorder %s18, 1
    %p83 = por %p81, %p82
    %p85 = scmp.ne.s32.totalorder %s70, %s84
    %p86 = scmp.eq.s32.totalorder %s18, 0
    %p87 = por %p85, %p86
    %s89 = sadd.s32 %s88, 1
    %p92 = scmp.eq.s32.totalorder %s12, 1
    %p93 = scmp.ne.s32.totalorder %s88, %s90
    %p94 = scmp.eq.s32.totalorder %s12, 0
    %p95 = por %p93, %p94
    %p96 = scmp.ne.s32.totalorder %s88, %s90
    %p97 = scmp.eq.s32.totalorder %s17, 1
    %p98 = por %p96, %p97
    %p99 = scmp.ne.s32.totalorder %s90, %s91
    %p100 = scmp.eq.s32.totalorder %s17, 0
    %p101 = por %p99, %p100
    %p102 = scmp.ne.s32.totalorder %s90, %s91
    %p103 = scmp.eq.s32.totalorder %s18, 1
    %p104 = por %p102, %p103
    %p106 = scmp.ne.s32.totalorder %s91, %s105
    %p107 = scmp.eq.s32.totalorder %s18, 0
    %p108 = por %p106, %p107
    %s110 = sadd.s32 %s109, 1
    %p113 = scmp.eq.s32.totalorder %s12, 1
    %p114 = scmp.ne.s32.totalorder %s109, %s111
    %p115 = scmp.eq.s32.totalorder %s12, 0
    %p116 = por %p114, %p115
    %p117 = scmp.ne.s32.totalorder %s109, %s111
    %p118 = scmp.eq.s32.totalorder %s17, 1
    %p119 = por %p117, %p118
    %p120 = scmp.ne.s32.totalorder %s111, %s112
    %p121 = scmp.eq.s32.totalorder %s17, 0
    %p122 = por %p120, %p121
    %p123 = scmp.ne.s32.totalorder %s111, %s112
    %p124 = scmp.eq.s32.totalorder %s18, 1
    %p125 = por %p123, %p124
    %p127 = scmp.ne.s32.totalorder %s112, %s126
    %p128 = scmp.eq.s32.totalorder %s18, 0
    %p129 = por %p127, %p128
    %s131 = sadd.s32 %s130, 1
    %p134 = scmp.eq.s32.totalorder %s12, 1
    %p135 = scmp.ne.s32.totalorder %s130, %s132
    %p136 = scmp.eq.s32.totalorder %s12, 0
    %p137 = por %p135, %p136
    %p138 = scmp.ne.s32.totalorder %s130, %s132
    %p139 = scmp.eq.s32.totalorder %s17, 1
    %p140 = por %p138, %p139
    %p141 = scmp.ne.s32.totalorder %s132, %s133
    %p142 = scmp.eq.s32.totalorder %s17, 0
    %p143 = por %p141, %p142
    %p144 = scmp.ne.s32.totalorder %s132, %s133
    %p145 = scmp.eq.s32.totalorder %s18, 1
    %p146 = por %p144, %p145
    %p148 = scmp.ne.s32.totalorder %s133, %s147
    %p149 = scmp.eq.s32.totalorder %s18, 0
    %p150 = por %p148, %p149
    %s151 = ssub.s32 %s12, %s19
    %p152 = scmp.eq.s32.totalorder %s151, 0
    %s154 = sadd.s32 %s153, 1
    %s155 = scalar_select %p152, %s153, %s154
    %p158 = pneg %p152
    %p159 = scmp.eq.s32.totalorder %s12, 1
    %p160 = por %p158, %p159
    %p161 = scmp.ne.s32.totalorder %s153, %s156
    %p162 = scmp.eq.s32.totalorder %s12, 0
    %p163 = por %p161, %p162
    %p164 = scmp.ne.s32.totalorder %s153, %s156
    %p165 = scmp.eq.s32.totalorder %s17, 1
    %p166 = por %p164, %p165
    %p167 = scmp.ne.s32.totalorder %s156, %s157
    %p168 = scmp.eq.s32.totalorder %s17, 0
    %p169 = por %p167, %p168
    %p170 = scmp.ne.s32.totalorder %s156, %s157
    %p171 = scmp.eq.s32.totalorder %s18, 1
    %p172 = por %p170, %p171
    %p174 = scmp.ne.s32.totalorder %s157, %s173
    %p175 = scmp.eq.s32.totalorder %s18, 0
    %p176 = por %p174, %p175
    %p177 = scmp.le.s32.totalorder 1, %s12
    %p178 = scmp.lt.s32.totalorder %s12, 3
    %p179 = pnand %p177, %p178
    %p180 = pneg %p179
    // Predicated region
    $region9: #{conv_block.1} parent=5 // pred_check
      _
    $region10: #{conv_block.1} parent=5 // pred_check_branch
      %182 = sbr.rel (%p179) target = $region12
    $region11: #{conv_block.1} parent=5 // pred_region
      %s183 = ssub.s32 %s12, 1
      // Predicated region
      $region13: #{conv_block.1} parent=11 // pred_check
        %p184 = pneg %p59
      $region14: #{conv_block.1} parent=11 // pred_check_branch
        %186 = sbr.rel (%p184) target = $region16
      $region15: #{conv_block.1} parent=11 // pred_region
        _
      $region16: #{conv_block.1} parent=11 // pred_fallthru
        _
      // Predicated region
      $region17: #{conv_block.1} parent=11 // pred_check
        %p187 = pneg %p80
      $region18: #{conv_block.1} parent=11 // pred_check_branch
        %189 = sbr.rel (%p187) target = $region20
      $region19: #{conv_block.1} parent=11 // pred_region
        _
      $region20: #{conv_block.1} parent=11 // pred_fallthru
        _
      // Predicated region
      $region21: #{conv_block.1} parent=11 // pred_check
        %p190 = pneg %p101
      $region22: #{conv_block.1} parent=11 // pred_check_branch
        %192 = sbr.rel (%p190) target = $region24
      $region23: #{conv_block.1} parent=11 // pred_region
        _
      $region24: #{conv_block.1} parent=11 // pred_fallthru
        _
      // Predicated region
      $region25: #{conv_block.1} parent=11 // pred_check
        %p193 = pneg %p122
      $region26: #{conv_block.1} parent=11 // pred_check_branch
        %195 = sbr.rel (%p193) target = $region28
      $region27: #{conv_block.1} parent=11 // pred_region
        _
      $region28: #{conv_block.1} parent=11 // pred_fallthru
        _
      // Predicated region
      $region29: #{conv_block.1} parent=11 // pred_check
        %p196 = pneg %p143
      $region30: #{conv_block.1} parent=11 // pred_check_branch
        %198 = sbr.rel (%p196) target = $region32
      $region31: #{conv_block.1} parent=11 // pred_region
        _
      $region32: #{conv_block.1} parent=11 // pred_fallthru
        _
    $region12: #{conv_block.1} parent=5 // pred_fallthru
      _
    %p199 = scmp.lt.s32.totalorder %s12, 2
    // Predicated region
    $region33: #{conv_block.1} parent=5 // pred_check
      %p200 = pneg %p199
    $region34: #{conv_block.1} parent=5 // pred_check_branch
      %202 = sbr.rel (%p200) target = $region36
    $region35: #{conv_block.1} parent=5 // pred_region
      // Predicated region
      $region37: #{conv_block.1} parent=35 // pred_check
        %p203 = pneg %p32
      $region38: #{conv_block.1} parent=35 // pred_check_branch
        %205 = sbr.rel (%p203) target = $region40
      $region39: #{conv_block.1} parent=35 // pred_region
        %p206 = scmp.lt.s32.totalorder %s12, 1
        %s207 = scalar_select %p206, %s12, 1
        %s208 = smul.addr %s207, 10
        %s209 = smul.addr %s208, 4
        %s210 = scalar_lea.vmem %s0, %s209
      $region40: #{conv_block.1} parent=35 // pred_fallthru
        _
    $region36: #{conv_block.1} parent=5 // pred_fallthru
      _
    %p211 = scmp.le.s32.totalorder 1, %s12
    %p212 = scmp.lt.s32.totalorder %s12, 3
    %p213 = pnand %p211, %p212
    %p214 = pneg %p213
    // Predicated region
    $region41: #{conv_block.1} parent=5 // pred_check
      _
    $region42: #{conv_block.1} parent=5 // pred_check_branch
      %216 = sbr.rel (%p213) target = $region44
    $region43: #{conv_block.1} parent=5 // pred_region
      %s217 = ssub.s32 %s12, 1
      %p218 = scmp.lt.s32.totalorder %s17, 1
      %s219 = scalar_select %p218, %s17, 1
      %s220 = smul.addr %s219, 10
      %s221 = smul.addr %s220, 4
      %s222 = scalar_lea.vmem %s0, %s221
      %p223 = pneg %p38
      %p224 = pneg %p35
      %p225 = pneg %p59
      %p226 = pneg %p56
      %p227 = pneg %p80
      %p228 = pneg %p77
      %p229 = pneg %p101
      %p230 = pneg %p98
      %p231 = pneg %p122
      %p232 = pneg %p119
      %p233 = pneg %p143
      %p234 = pneg %p140
      %p235 = pneg %p169
      %p236 = pneg %p166
      %p237 = scmp.lt.s32.totalorder %s17, 1
      %s238 = scalar_select %p237, %s17, 1
      %s239 = smul.addr %s238, 4
      %s240 = smul.addr %s239, 8
      %s241 = scalar_lea.vmem %s6, %s240
      %p242 = scmp.lt.s32.totalorder %s17, 1
      %s243 = scalar_select %p242, %s17, 1
      %s244 = smul.addr %s243, 10
      %s245 = smul.addr %s244, 4
      %s246 = scalar_lea.vmem %s0, %s245
      %p247 = scmp.lt.s32.totalorder %s17, 1
      %s248 = scalar_select %p247, %s17, 1
      %s249 = smul.addr %s248, 4
      %s250 = smul.addr %s249, 8
      %s251 = scalar_lea.vmem %s6, %s250
      %v253 = vld [vmem:[%s5] sm:$0x3]
      %v254 = vld [vmem:[%s2] sm:$0xff]
      %v255 = vld [vmem:[%s1] sm:$0xff]
      %v256 = vld [vmem:[%s246] sm:$0xff]
      %v257 = vld [vmem:[%s246 + $0x14] sm:$0xff]
      %258 = vst [vmem:[#allocation2] sm:$0xff] %v256
      %259 = vst [vmem:[#allocation2 + $0x8] sm:$0xff] %v257
      %v260 = vld [vmem:[%s246] sm:$0xff]
      %v261 = vld [vmem:[%s246 + $0x8] sm:$0xf]
      %v262 = vld [vmem:[%s246 + $0x14] sm:$0xff]
      %v263 = vld [vmem:[%s246 + $0x1c] sm:$0xf]
      %268 = vrot.lane.b32.xlu0 %v260, 127
      %v269 = vpop.permute.xlu0 %268
      %270 = vrot.lane.b32.xlu0 %v261, 127
      %v271 = vpop.permute.xlu0 %270
      %272 = vrot.lane.b32.xlu0 %v262, 127
      %v273 = vpop.permute.xlu0 %272
      %274 = vrot.lane.b32.xlu0 %v263, 127
      %v275 = vpop.permute.xlu0 %274
      %v276 = vrot.slane %v269, 4
      %v277 = vrot.slane %v271, 4
      %v278 = vrot.slane %v273, 4
      %v279 = vrot.slane %v275, 4
      %vm280 = vcmask 1043456
      %v281 = vsel %vm280, %v276, %v277
      %vm282 = vcmask 1039360
      %v283 = vsel %vm282, %v269, %v281
      %v284 = vsel %vm280, %v278, %v279
      %v285 = vsel %vm282, %v273, %v284
      %288 = vst [vmem:[#allocation2 + $0x10] sm:$0xff] %v283
      %289 = vst [vmem:[#allocation2 + $0x18] sm:$0xff] %v285
      %v290 = vld [vmem:[%s246] sm:$0xff]
      %v291 = vld [vmem:[%s246 + $0x8] sm:$0xf]
      %v292 = vld [vmem:[%s246 + $0x14] sm:$0xff]
      %v293 = vld [vmem:[%s246 + $0x1c] sm:$0xf]
      %298 = vrot.lane.b32.xlu0 %v290, 126
      %v299 = vpop.permute.xlu0 %298
      %300 = vrot.lane.b32.xlu0 %v291, 126
      %v301 = vpop.permute.xlu0 %300
      %302 = vrot.lane.b32.xlu0 %v292, 126
      %v303 = vpop.permute.xlu0 %302
      %304 = vrot.lane.b32.xlu0 %v293, 126
      %v305 = vpop.permute.xlu0 %304
      %v306 = vrot.slane %v299, 4
      %v307 = vrot.slane %v301, 4
      %v308 = vrot.slane %v303, 4
      %v309 = vrot.slane %v305, 4
      %v310 = vsel %vm280, %v306, %v307
      %vm311 = vcmask 1031168
      %v312 = vsel %vm311, %v299, %v310
      %v313 = vsel %vm280, %v308, %v309
      %v314 = vsel %vm311, %v303, %v313
      %317 = vst [vmem:[#allocation2 + $0x20] sm:$0xff] %v312
      %318 = vst [vmem:[#allocation2 + $0x28] sm:$0xff] %v314
      %v319 = vld [vmem:[%s246] sm:$0xff]
      %v320 = vld [vmem:[%s246 + $0x8] sm:$0xf]
      %v321 = vld [vmem:[%s246 + $0x14] sm:$0xff]
      %v322 = vld [vmem:[%s246 + $0x1c] sm:$0xf]
      %327 = vrot.lane.b32.xlu0 %v319, 96
      %v328 = vpop.permute.xlu0 %327
      %329 = vrot.lane.b32.xlu0 %v320, 96
      %v330 = vpop.permute.xlu0 %329
      %331 = vrot.lane.b32.xlu0 %v321, 96
      %v332 = vpop.permute.xlu0 %331
      %333 = vrot.lane.b32.xlu0 %v322, 96
      %v334 = vpop.permute.xlu0 %333
      %v335 = vrot.slane %v328, 4
      %v336 = vrot.slane %v330, 4
      %v337 = vrot.slane %v332, 4
      %v338 = vrot.slane %v334, 4
      %v339 = vsel %vm280, %v335, %v336
      %vm340 = vcmask 785408
      %v341 = vsel %vm340, %v328, %v339
      %v342 = vsel %vm280, %v337, %v338
      %v343 = vsel %vm340, %v332, %v342
      %346 = vst [vmem:[#allocation2 + $0x30] sm:$0xff] %v341
      %347 = vst [vmem:[#allocation2 + $0x38] sm:$0xff] %v343
      %v348 = vld [vmem:[%s246] sm:$0xff]
      %v349 = vld [vmem:[%s246 + $0x8] sm:$0xf]
      %v350 = vld [vmem:[%s246 + $0x14] sm:$0xff]
      %v351 = vld [vmem:[%s246 + $0x1c] sm:$0xf]
      %356 = vrot.lane.b32.xlu0 %v348, 95
      %v357 = vpop.permute.xlu0 %356
      %358 = vrot.lane.b32.xlu0 %v349, 95
      %v359 = vpop.permute.xlu0 %358
      %360 = vrot.lane.b32.xlu0 %v350, 95
      %v361 = vpop.permute.xlu0 %360
      %362 = vrot.lane.b32.xlu0 %v351, 95
      %v363 = vpop.permute.xlu0 %362
      %v364 = vrot.slane %v357, 4
      %v365 = vrot.slane %v359, 4
      %v366 = vrot.slane %v361, 4
      %v367 = vrot.slane %v363, 4
      %v368 = vsel %vm280, %v364, %v365
      %vm369 = vcmask 777216
      %v370 = vsel %vm369, %v357, %v368
      %v371 = vsel %vm280, %v366, %v367
      %v372 = vsel %vm369, %v361, %v371
      %375 = vst [vmem:[#allocation2 + $0x40] sm:$0xff] %v370
      %376 = vst [vmem:[#allocation2 + $0x48] sm:$0xff] %v372
      %v377 = vld [vmem:[%s246] sm:$0xff]
      %v378 = vld [vmem:[%s246 + $0x8] sm:$0xf]
      %v379 = vld [vmem:[%s246 + $0x14] sm:$0xff]
      %v380 = vld [vmem:[%s246 + $0x1c] sm:$0xf]
      %385 = vrot.lane.b32.xlu0 %v377, 94
      %v386 = vpop.permute.xlu0 %385
      %387 = vrot.lane.b32.xlu0 %v378, 94
      %v388 = vpop.permute.xlu0 %387
      %389 = vrot.lane.b32.xlu0 %v379, 94
      %v390 = vpop.permute.xlu0 %389
      %391 = vrot.lane.b32.xlu0 %v380, 94
      %v392 = vpop.permute.xlu0 %391
      %v393 = vrot.slane %v386, 4
      %v394 = vrot.slane %v388, 4
      %v395 = vrot.slane %v390, 4
      %v396 = vrot.slane %v392, 4
      %v397 = vsel %vm280, %v393, %v394
      %vm398 = vcmask 769024
      %v399 = vsel %vm398, %v386, %v397
      %v400 = vsel %vm280, %v395, %v396
      %v401 = vsel %vm398, %v390, %v400
      %404 = vst [vmem:[#allocation2 + $0x50] sm:$0xff] %v399
      %405 = vst [vmem:[#allocation2 + $0x58] sm:$0xff] %v401
      %v406 = vld [vmem:[%s246] sm:$0xff]
      %v407 = vld [vmem:[%s246 + $0x8] sm:$0xf]
      %v408 = vld [vmem:[%s246 + $0x14] sm:$0xff]
      %v409 = vld [vmem:[%s246 + $0x1c] sm:$0xf]
      %414 = vrot.lane.b32.xlu0 %v406, 64
      %v415 = vpop.permute.xlu0 %414
      %416 = vrot.lane.b32.xlu0 %v407, 64
      %v417 = vpop.permute.xlu0 %416
      %418 = vrot.lane.b32.xlu0 %v408, 64
      %v419 = vpop.permute.xlu0 %418
      %420 = vrot.lane.b32.xlu0 %v409, 64
      %v421 = vpop.permute.xlu0 %420
      %v422 = vrot.slane %v415, 4
      %v423 = vrot.slane %v417, 4
      %v424 = vrot.slane %v419, 4
      %v425 = vrot.slane %v421, 4
      %v426 = vsel %vm280, %v422, %v423
      %vm427 = vcmask 523264
      %v428 = vsel %vm427, %v415, %v426
      %v429 = vsel %vm280, %v424, %v425
      %v430 = vsel %vm427, %v419, %v429
      %433 = vst [vmem:[#allocation2 + $0x60] sm:$0xff] %v428
      %434 = vst [vmem:[#allocation2 + $0x68] sm:$0xff] %v430
      %v435 = vld [vmem:[%s246] sm:$0xff]
      %v436 = vld [vmem:[%s246 + $0x8] sm:$0xf]
      %v437 = vld [vmem:[%s246 + $0x14] sm:$0xff]
      %v438 = vld [vmem:[%s246 + $0x1c] sm:$0xf]
      %443 = vrot.lane.b32.xlu0 %v435, 63
      %v444 = vpop.permute.xlu0 %443
      %445 = vrot.lane.b32.xlu0 %v436, 63
      %v446 = vpop.permute.xlu0 %445
      %447 = vrot.lane.b32.xlu0 %v437, 63
      %v448 = vpop.permute.xlu0 %447
      %449 = vrot.lane.b32.xlu0 %v438, 63
      %v450 = vpop.permute.xlu0 %449
      %v451 = vrot.slane %v444, 4
      %v452 = vrot.slane %v446, 4
      %v453 = vrot.slane %v448, 4
      %v454 = vrot.slane %v450, 4
      %v455 = vsel %vm280, %v451, %v452
      %vm456 = vcmask 515072
      %v457 = vsel %vm456, %v444, %v455
      %v458 = vsel %vm280, %v453, %v454
      %v459 = vsel %vm456, %v448, %v458
      %462 = vst [vmem:[#allocation2 + $0x70] sm:$0xff] %v457
      %463 = vst [vmem:[#allocation2 + $0x78] sm:$0xff] %v459
      %v464 = vld [vmem:[%s246] sm:$0xff]
      %v465 = vld [vmem:[%s246 + $0x8] sm:$0xf]
      %v466 = vld [vmem:[%s246 + $0x14] sm:$0xff]
      %v467 = vld [vmem:[%s246 + $0x1c] sm:$0xf]
      %472 = vrot.lane.b32.xlu0 %v464, 62
      %v473 = vpop.permute.xlu0 %472
      %474 = vrot.lane.b32.xlu0 %v465, 62
      %v475 = vpop.permute.xlu0 %474
      %476 = vrot.lane.b32.xlu0 %v466, 62
      %v477 = vpop.permute.xlu0 %476
      %478 = vrot.lane.b32.xlu0 %v467, 62
      %v479 = vpop.permute.xlu0 %478
      %v480 = vrot.slane %v473, 4
      %v481 = vrot.slane %v475, 4
      %v482 = vrot.slane %v477, 4
      %v483 = vrot.slane %v479, 4
      %v484 = vsel %vm280, %v480, %v481
      %vm485 = vcmask 506880
      %v486 = vsel %vm485, %v473, %v484
      %v487 = vsel %vm280, %v482, %v483
      %v488 = vsel %vm485, %v477, %v487
      %491 = vst [vmem:[#allocation2 + $0x80] sm:$0xff] %v486
      %492 = vst [vmem:[#allocation2 + $0x88] sm:$0xff] %v488
      %v493 = vld [vmem:[#allocation2] sm:$0xff]
      %v494 = vld [vmem:[#allocation2 + $0x8] sm:$0xff]
      %v495 = vld [vmem:[#allocation2 + $0x10] sm:$0xff]
      %v496 = vld [vmem:[#allocation2 + $0x18] sm:$0xff]
      %v497 = vld [vmem:[#allocation2 + $0x20] sm:$0xff]
      %v498 = vld [vmem:[#allocation2 + $0x28] sm:$0xff]
      %v499 = vld [vmem:[#allocation2 + $0x30] sm:$0xff]
      %v500 = vld [vmem:[#allocation2 + $0x38] sm:$0xff]
      %v501 = vld [vmem:[#allocation2 + $0x40] sm:$0xff]
      %v502 = vld [vmem:[#allocation2 + $0x48] sm:$0xff]
      %v503 = vld [vmem:[#allocation2 + $0x50] sm:$0xff]
      %v504 = vld [vmem:[#allocation2 + $0x58] sm:$0xff]
      %v505 = vld [vmem:[#allocation2 + $0x60] sm:$0xff]
      %v506 = vld [vmem:[#allocation2 + $0x68] sm:$0xff]
      %v507 = vld [vmem:[#allocation2 + $0x70] sm:$0xff]
      %v508 = vld [vmem:[#allocation2 + $0x78] sm:$0xff]
      %v509 = vld [vmem:[#allocation2 + $0x80] sm:$0xff]
      %v510 = vld [vmem:[#allocation2 + $0x88] sm:$0xff]
      %512 = vset.pattern.permute.xlu0 0
      %513 = vperm.xlu0 %512, %v254
      %v514 = vpop.permute.xlu0 %513
      %v517 = vunpack.c.l.b16 %v255
      %v518 = vunpack.c.h.b16 %v255
      %v519 = vpack.c.b16 %v517, %v517
      %v520 = vpack.c.b16 %v518, %v518
      %v540 = vunpack.c.l.b16 %v493
      %v541 = vunpack.c.h.b16 %v493
      %v542 = vunpack.c.l.b16 %v494
      %v543 = vunpack.c.h.b16 %v494
      %v544 = vunpack.c.l.b16 %v495
      %v545 = vunpack.c.h.b16 %v495
      %v546 = vunpack.c.l.b16 %v496
      %v547 = vunpack.c.h.b16 %v496
      %v548 = vunpack.c.l.b16 %v497
      %v549 = vunpack.c.h.b16 %v497
      %v550 = vunpack.c.l.b16 %v498
      %v551 = vunpack.c.h.b16 %v498
      %v552 = vunpack.c.l.b16 %v499
      %v553 = vunpack.c.h.b16 %v499
      %v554 = vunpack.c.l.b16 %v500
      %v555 = vunpack.c.h.b16 %v500
      %v556 = vunpack.c.l.b16 %v501
      %v557 = vunpack.c.h.b16 %v501
      %v558 = vunpack.c.l.b16 %v502
      %v559 = vunpack.c.h.b16 %v502
      %v560 = vunpack.c.l.b16 %v503
      %v561 = vunpack.c.h.b16 %v503
      %v562 = vunpack.c.l.b16 %v504
      %v563 = vunpack.c.h.b16 %v504
      %v564 = vunpack.c.l.b16 %v505
      %v565 = vunpack.c.h.b16 %v505
      %v566 = vunpack.c.l.b16 %v506
      %v567 = vunpack.c.h.b16 %v506
      %v568 = vunpack.c.l.b16 %v507
      %v569 = vunpack.c.h.b16 %v507
      %v570 = vunpack.c.l.b16 %v508
      %v571 = vunpack.c.h.b16 %v508
      %v572 = vunpack.c.l.b16 %v509
      %v573 = vunpack.c.h.b16 %v509
      %v574 = vunpack.c.l.b16 %v510
      %v575 = vunpack.c.h.b16 %v510
      %v576 = vpack.c.b16 %v542, %v540
      %v577 = vpack.c.b16 %v543, %v541
      %v578 = vpack.c.b16 %v546, %v544
      %v579 = vpack.c.b16 %v547, %v545
      %v580 = vpack.c.b16 %v550, %v548
      %v581 = vpack.c.b16 %v551, %v549
      %v582 = vpack.c.b16 %v554, %v552
      %v583 = vpack.c.b16 %v555, %v553
      %v584 = vpack.c.b16 %v558, %v556
      %v585 = vpack.c.b16 %v559, %v557
      %v586 = vpack.c.b16 %v562, %v560
      %v587 = vpack.c.b16 %v563, %v561
      %v588 = vpack.c.b16 %v566, %v564
      %v589 = vpack.c.b16 %v567, %v565
      %v590 = vpack.c.b16 %v570, %v568
      %v591 = vpack.c.b16 %v571, %v569
      %v592 = vpack.c.b16 %v574, %v572
      %v593 = vpack.c.b16 %v575, %v573
      %vm612 = vcmask 130048
      %v614 = vsel %vm612, %v520, 0
      %616 = vmatprep.subr.bf16.mxu0 %v591
      %617 = vmatpush1.bf16.msra.mxu0 %v590
      %618 = vmatprep.subr.bf16.mxu0 %v589
      %619 = vmatpush1.bf16.msra.mxu0 %v588
      %620 = vmatprep.subr.bf16.mxu0 %v587
      %621 = vmatpush1.bf16.msra.mxu0 %v586
      %622 = vmatprep.subr.bf16.mxu0 %v585
      %623 = vmatpush1.bf16.msra.mxu0 %v584
      %624 = vmatprep.subr.bf16.mxu0 %v583
      %625 = vmatpush1.bf16.msra.mxu0 %v582
      %626 = vmatprep.subr.bf16.mxu0 %v581
      %627 = vmatpush1.bf16.msra.mxu0 %v580
      %628 = vmatprep.subr.bf16.mxu0 %v579
      %629 = vmatpush1.bf16.msra.mxu0 %v578
      %630 = vmatprep.subr.bf16.mxu0 %v577
      %631 = vmatpush1.bf16.msra.mxu0 %v576
      %632 = vmatprep.subr.bf16.mxu0 0
      %633 = vmatpush2.bf16.msra.mxu0 0
      %634 = vmatprep.subr.bf16.mxu0 0
      %635 = vmatpush2.bf16.msra.mxu0 0
      %636 = vmatprep.subr.bf16.mxu0 0
      %637 = vmatpush2.bf16.msra.mxu0 0
      %638 = vmatprep.subr.bf16.mxu0 0
      %639 = vmatpush2.bf16.msra.mxu0 0
      %640 = vmatprep.subr.bf16.mxu0 0
      %641 = vmatpush2.bf16.msra.mxu0 0
      %642 = vmatprep.subr.bf16.mxu0 0
      %643 = vmatpush2.bf16.msra.mxu0 0
      %644 = vmatprep.subr.bf16.mxu0 0
      %645 = vmatpush2.bf16.msra.mxu0 0
      %646 = vmatprep.subr.bf16.mxu0 %v593
      %647 = vmatpush2.bf16.msra.mxu0 %v592
      %648 = vmatprep.mubr.bf16.mxu0 %v614
      %649 = vmatmul.mubr.bf16.gmra.mxu0 %v519
      %v650 = vpop.f32.mrf.mxu0
      %v651 = vadd.f32 %v514, %v650
      %v652 = vpop.f32.mrf.mxu0
      %v653 = vadd.f32 %v514, %v652
      %v654 = vpop.f32.mrf.mxu0
      %v655 = vpop.f32.mrf.mxu0
      %656 = vdwg.mxu0
      %657 = vst [vmem:[%s251] sm:$0xff] %v651
      %658 = vst [vmem:[%s251 + $0x8] sm:$0xff] %v653
      %v660 = vlaneseq
      %v661 = vshrl.u32 %v660, 7
      %v662 = vsub.s32 0, %v661
      %v663 = vrot.slane %v253, %v662
      %v664 = vlaneseq
      %v665 = vshrl.u32 %v664, 7
      %v666 = vsub.s32 1, %v665
      %v667 = vrot.slane %v253, %v666
      %v670 = vmul.f32 %v651, %v663
      %v671 = vmul.f32 %v653, %v667
      %v672 = vadd.f32 %v670, %v671
      %673 = vadd.xlane.f32.xlu0 %v672
      %v674 = vpop.xlane.xlu0 %673
      %v675 = vadd.f32 %v674, 0.0
      %v676 = vmul.f32 %v670, %v651
      %v677 = vmul.f32 %v671, %v653
      %v678 = vadd.f32 %v676, %v677
      %679 = vadd.xlane.f32.xlu0 %v678
      %v680 = vpop.xlane.xlu0 %679
      %v681 = vadd.f32 %v680, 0.0
      %v682 = vld [vmem:[%s246 + $0x8] sm:$0xff]
      %v683 = vld [vmem:[%s246 + $0x1c] sm:$0xff]
      %684 = vst [vmem:[#allocation2] sm:$0xff] %v682
      %685 = vst [vmem:[#allocation2 + $0x8] sm:$0xff] %v683
      %v686 = vld [vmem:[%s246 + $0x8] sm:$0xff]
      %v687 = vld [vmem:[%s246 + $0x10] sm:$0xf]
      %v688 = vld [vmem:[%s246 + $0x1c] sm:$0xff]
      %v689 = vld [vmem:[%s246 + $0x24] sm:$0xf]
      %694 = vrot.lane.b32.xlu0 %v686, 127
      %v695 = vpop.permute.xlu0 %694
      %696 = vrot.lane.b32.xlu0 %v687, 127
      %v697 = vpop.permute.xlu0 %696
      %698 = vrot.lane.b32.xlu0 %v688, 127
      %v699 = vpop.permute.xlu0 %698
      %700 = vrot.lane.b32.xlu0 %v689, 127
      %v701 = vpop.permute.xlu0 %700
      %v702 = vrot.slane %v695, 4
      %v703 = vrot.slane %v697, 4
      %v704 = vrot.slane %v699, 4
      %v705 = vrot.slane %v701, 4
      %v706 = vsel %vm280, %v702, %v703
      %v707 = vsel %vm282, %v695, %v706
      %v708 = vsel %vm280, %v704, %v705
      %v709 = vsel %vm282, %v699, %v708
      %712 = vst [vmem:[#allocation2 + $0x10] sm:$0xff] %v707
      %713 = vst [vmem:[#allocation2 + $0x18] sm:$0xff] %v709
      %v714 = vld [vmem:[%s246 + $0x8] sm:$0xff]
      %v715 = vld [vmem:[%s246 + $0x10] sm:$0xf]
      %v716 = vld [vmem:[%s246 + $0x1c] sm:$0xff]
      %v717 = vld [vmem:[%s246 + $0x24] sm:$0xf]
      %722 = vrot.lane.b32.xlu0 %v714, 126
      %v723 = vpop.permute.xlu0 %722
      %724 = vrot.lane.b32.xlu0 %v715, 126
      %v725 = vpop.permute.xlu0 %724
      %726 = vrot.lane.b32.xlu0 %v716, 126
      %v727 = vpop.permute.xlu0 %726
      %728 = vrot.lane.b32.xlu0 %v717, 126
      %v729 = vpop.permute.xlu0 %728
      %v730 = vrot.slane %v723, 4
      %v731 = vrot.slane %v725, 4
      %v732 = vrot.slane %v727, 4
      %v733 = vrot.slane %v729, 4
      %v734 = vsel %vm280, %v730, %v731
      %v735 = vsel %vm311, %v723, %v734
      %v736 = vsel %vm280, %v732, %v733
      %v737 = vsel %vm311, %v727, %v736
      %740 = vst [vmem:[#allocation2 + $0x20] sm:$0xff] %v735
      %741 = vst [vmem:[#allocation2 + $0x28] sm:$0xff] %v737
      %v742 = vld [vmem:[%s246 + $0x8] sm:$0xff]
      %v743 = vld [vmem:[%s246 + $0x10] sm:$0xf]
      %v744 = vld [vmem:[%s246 + $0x1c] sm:$0xff]
      %v745 = vld [vmem:[%s246 + $0x24] sm:$0xf]
      %750 = vrot.lane.b32.xlu0 %v742, 96
      %v751 = vpop.permute.xlu0 %750
      %752 = vrot.lane.b32.xlu0 %v743, 96
      %v753 = vpop.permute.xlu0 %752
      %754 = vrot.lane.b32.xlu0 %v744, 96
      %v755 = vpop.permute.xlu0 %754
      %756 = vrot.lane.b32.xlu0 %v745, 96
      %v757 = vpop.permute.xlu0 %756
      %v758 = vrot.slane %v751, 4
      %v759 = vrot.slane %v753, 4
      %v760 = vrot.slane %v755, 4
      %v761 = vrot.slane %v757, 4
      %v762 = vsel %vm280, %v758, %v759
      %v763 = vsel %vm340, %v751, %v762
      %v764 = vsel %vm280, %v760, %v761
      %v765 = vsel %vm340, %v755, %v764
      %768 = vst [vmem:[#allocation2 + $0x30] sm:$0xff] %v763
      %769 = vst [vmem:[#allocation2 + $0x38] sm:$0xff] %v765
      %v770 = vld [vmem:[%s246 + $0x8] sm:$0xff]
      %v771 = vld [vmem:[%s246 + $0x10] sm:$0xf]
      %v772 = vld [vmem:[%s246 + $0x1c] sm:$0xff]
      %v773 = vld [vmem:[%s246 + $0x24] sm:$0xf]
      %778 = vrot.lane.b32.xlu0 %v770, 95
      %v779 = vpop.permute.xlu0 %778
      %780 = vrot.lane.b32.xlu0 %v771, 95
      %v781 = vpop.permute.xlu0 %780
      %782 = vrot.lane.b32.xlu0 %v772, 95
      %v783 = vpop.permute.xlu0 %782
      %784 = vrot.lane.b32.xlu0 %v773, 95
      %v785 = vpop.permute.xlu0 %784
      %v786 = vrot.slane %v779, 4
      %v787 = vrot.slane %v781, 4
      %v788 = vrot.slane %v783, 4
      %v789 = vrot.slane %v785, 4
      %v790 = vsel %vm280, %v786, %v787
      %v791 = vsel %vm369, %v779, %v790
      %v792 = vsel %vm280, %v788, %v789
      %v793 = vsel %vm369, %v783, %v792
      %796 = vst [vmem:[#allocation2 + $0x40] sm:$0xff] %v791
      %797 = vst [vmem:[#allocation2 + $0x48] sm:$0xff] %v793
      %v798 = vld [vmem:[%s246 + $0x8] sm:$0xff]
      %v799 = vld [vmem:[%s246 + $0x10] sm:$0xf]
      %v800 = vld [vmem:[%s246 + $0x1c] sm:$0xff]
      %v801 = vld [vmem:[%s246 + $0x24] sm:$0xf]
      %806 = vrot.lane.b32.xlu0 %v798, 94
      %v807 = vpop.permute.xlu0 %806
      %808 = vrot.lane.b32.xlu0 %v799, 94
      %v809 = vpop.permute.xlu0 %808
      %810 = vrot.lane.b32.xlu0 %v800, 94
      %v811 = vpop.permute.xlu0 %810
      %812 = vrot.lane.b32.xlu0 %v801, 94
      %v813 = vpop.permute.xlu0 %812
      %v814 = vrot.slane %v807, 4
      %v815 = vrot.slane %v809, 4
      %v816 = vrot.slane %v811, 4
      %v817 = vrot.slane %v813, 4
      %v818 = vsel %vm280, %v814, %v815
      %v819 = vsel %vm398, %v807, %v818
      %v820 = vsel %vm280, %v816, %v817
      %v821 = vsel %vm398, %v811, %v820
      %824 = vst [vmem:[#allocation2 + $0x50] sm:$0xff] %v819
      %825 = vst [vmem:[#allocation2 + $0x58] sm:$0xff] %v821
      %v826 = vld [vmem:[%s246 + $0x8] sm:$0xff]
      %v827 = vld [vmem:[%s246 + $0x10] sm:$0xf]
      %v828 = vld [vmem:[%s246 + $0x1c] sm:$0xff]
      %v829 = vld [vmem:[%s246 + $0x24] sm:$0xf]
      %834 = vrot.lane.b32.xlu0 %v826, 64
      %v835 = vpop.permute.xlu0 %834
      %836 = vrot.lane.b32.xlu0 %v827, 64
      %v837 = vpop.permute.xlu0 %836
      %838 = vrot.lane.b32.xlu0 %v828, 64
      %v839 = vpop.permute.xlu0 %838
      %840 = vrot.lane.b32.xlu0 %v829, 64
      %v841 = vpop.permute.xlu0 %840
      %v842 = vrot.slane %v835, 4
      %v843 = vrot.slane %v837, 4
      %v844 = vrot.slane %v839, 4
      %v845 = vrot.slane %v841, 4
      %v846 = vsel %vm280, %v842, %v843
      %v847 = vsel %vm427, %v835, %v846
      %v848 = vsel %vm280, %v844, %v845
      %v849 = vsel %vm427, %v839, %v848
      %852 = vst [vmem:[#allocation2 + $0x60] sm:$0xff] %v847
      %853 = vst [vmem:[#allocation2 + $0x68] sm:$0xff] %v849
      %v854 = vld [vmem:[%s246 + $0x8] sm:$0xff]
      %v855 = vld [vmem:[%s246 + $0x10] sm:$0xf]
      %v856 = vld [vmem:[%s246 + $0x1c] sm:$0xff]
      %v857 = vld [vmem:[%s246 + $0x24] sm:$0xf]
      %862 = vrot.lane.b32.xlu0 %v854, 63
      %v863 = vpop.permute.xlu0 %862
      %864 = vrot.lane.b32.xlu0 %v855, 63
      %v865 = vpop.permute.xlu0 %864
      %866 = vrot.lane.b32.xlu0 %v856, 63
      %v867 = vpop.permute.xlu0 %866
      %868 = vrot.lane.b32.xlu0 %v857, 63
      %v869 = vpop.permute.xlu0 %868
      %v870 = vrot.slane %v863, 4
      %v871 = vrot.slane %v865, 4
      %v872 = vrot.slane %v867, 4
      %v873 = vrot.slane %v869, 4
      %v874 = vsel %vm280, %v870, %v871
      %v875 = vsel %vm456, %v863, %v874
      %v876 = vsel %vm280, %v872, %v873
      %v877 = vsel %vm456, %v867, %v876
      %880 = vst [vmem:[#allocation2 + $0x70] sm:$0xff] %v875
      %881 = vst [vmem:[#allocation2 + $0x78] sm:$0xff] %v877
      %v882 = vld [vmem:[%s246 + $0x8] sm:$0xff]
      %v883 = vld [vmem:[%s246 + $0x10] sm:$0xf]
      %v884 = vld [vmem:[%s246 + $0x1c] sm:$0xff]
      %v885 = vld [vmem:[%s246 + $0x24] sm:$0xf]
      %890 = vrot.lane.b32.xlu0 %v882, 62
      %v891 = vpop.permute.xlu0 %890
      %892 = vrot.lane.b32.xlu0 %v883, 62
      %v893 = vpop.permute.xlu0 %892
      %894 = vrot.lane.b32.xlu0 %v884, 62
      %v895 = vpop.permute.xlu0 %894
      %896 = vrot.lane.b32.xlu0 %v885, 62
      %v897 = vpop.permute.xlu0 %896
      %v898 = vrot.slane %v891, 4
      %v899 = vrot.slane %v893, 4
      %v900 = vrot.slane %v895, 4
      %v901 = vrot.slane %v897, 4
      %v902 = vsel %vm280, %v898, %v899
      %v903 = vsel %vm485, %v891, %v902
      %v904 = vsel %vm280, %v900, %v901
      %v905 = vsel %vm485, %v895, %v904
      %908 = vst [vmem:[#allocation2 + $0x80] sm:$0xff] %v903
      %909 = vst [vmem:[#allocation2 + $0x88] sm:$0xff] %v905
      %v910 = vld [vmem:[#allocation2] sm:$0xff]
      %v911 = vld [vmem:[#allocation2 + $0x8] sm:$0xff]
      %v912 = vld [vmem:[#allocation2 + $0x10] sm:$0xff]
      %v913 = vld [vmem:[#allocation2 + $0x18] sm:$0xff]
      %v914 = vld [vmem:[#allocation2 + $0x20] sm:$0xff]
      %v915 = vld [vmem:[#allocation2 + $0x28] sm:$0xff]
      %v916 = vld [vmem:[#allocation2 + $0x30] sm:$0xff]
      %v917 = vld [vmem:[#allocation2 + $0x38] sm:$0xff]
      %v918 = vld [vmem:[#allocation2 + $0x40] sm:$0xff]
      %v919 = vld [vmem:[#allocation2 + $0x48] sm:$0xff]
      %v920 = vld [vmem:[#allocation2 + $0x50] sm:$0xff]
      %v921 = vld [vmem:[#allocation2 + $0x58] sm:$0xff]
      %v922 = vld [vmem:[#allocation2 + $0x60] sm:$0xff]
      %v923 = vld [vmem:[#allocation2 + $0x68] sm:$0xff]
      %v924 = vld [vmem:[#allocation2 + $0x70] sm:$0xff]
      %v925 = vld [vmem:[#allocation2 + $0x78] sm:$0xff]
      %v926 = vld [vmem:[#allocation2 + $0x80] sm:$0xff]
      %v927 = vld [vmem:[#allocation2 + $0x88] sm:$0xff]
      %v946 = vunpack.c.l.b16 %v910
      %v947 = vunpack.c.h.b16 %v910
      %v948 = vunpack.c.l.b16 %v911
      %v949 = vunpack.c.h.b16 %v911
      %v950 = vunpack.c.l.b16 %v912
      %v951 = vunpack.c.h.b16 %v912
      %v952 = vunpack.c.l.b16 %v913
      %v953 = vunpack.c.h.b16 %v913
      %v954 = vunpack.c.l.b16 %v914
      %v955 = vunpack.c.h.b16 %v914
      %v956 = vunpack.c.l.b16 %v915
      %v957 = vunpack.c.h.b16 %v915
      %v958 = vunpack.c.l.b16 %v916
      %v959 = vunpack.c.h.b16 %v916
      %v960 = vunpack.c.l.b16 %v917
      %v961 = vunpack.c.h.b16 %v917
      %v962 = vunpack.c.l.b16 %v918
      %v963 = vunpack.c.h.b16 %v918
      %v964 = vunpack.c.l.b16 %v919
      %v965 = vunpack.c.h.b16 %v919
      %v966 = vunpack.c.l.b16 %v920
      %v967 = vunpack.c.h.b16 %v920
      %v968 = vunpack.c.l.b16 %v921
      %v969 = vunpack.c.h.b16 %v921
      %v970 = vunpack.c.l.b16 %v922
      %v971 = vunpack.c.h.b16 %v922
      %v972 = vunpack.c.l.b16 %v923
      %v973 = vunpack.c.h.b16 %v923
      %v974 = vunpack.c.l.b16 %v924
      %v975 = vunpack.c.h.b16 %v924
      %v976 = vunpack.c.l.b16 %v925
      %v977 = vunpack.c.h.b16 %v925
      %v978 = vunpack.c.l.b16 %v926
      %v979 = vunpack.c.h.b16 %v926
      %v980 = vunpack.c.l.b16 %v927
      %v981 = vunpack.c.h.b16 %v927
      %v982 = vpack.c.b16 %v948, %v946
      %v983 = vpack.c.b16 %v949, %v947
      %v984 = vpack.c.b16 %v952, %v950
      %v985 = vpack.c.b16 %v953, %v951
      %v986 = vpack.c.b16 %v956, %v954
      %v987 = vpack.c.b16 %v957, %v955
      %v988 = vpack.c.b16 %v960, %v958
      %v989 = vpack.c.b16 %v961, %v959
      %v990 = vpack.c.b16 %v964, %v962
      %v991 = vpack.c.b16 %v965, %v963
      %v992 = vpack.c.b16 %v968, %v966
      %v993 = vpack.c.b16 %v969, %v967
      %v994 = vpack.c.b16 %v972, %v970
      %v995 = vpack.c.b16 %v973, %v971
      %v996 = vpack.c.b16 %v976, %v974
      %v997 = vpack.c.b16 %v977, %v975
      %v998 = vpack.c.b16 %v980, %v978
      %v999 = vpack.c.b16 %v981, %v979
      %1018 = vmatprep.subr.bf16.mxu0 %v997
      %1019 = vmatpush1.bf16.msra.mxu0 %v996
      %1020 = vmatprep.subr.bf16.mxu0 %v995
      %1021 = vmatpush1.bf16.msra.mxu0 %v994
      %1022 = vmatprep.subr.bf16.mxu0 %v993
      %1023 = vmatpush1.bf16.msra.mxu0 %v992
      %1024 = vmatprep.subr.bf16.mxu0 %v991
      %1025 = vmatpush1.bf16.msra.mxu0 %v990
      %1026 = vmatprep.subr.bf16.mxu0 %v989
      %1027 = vmatpush1.bf16.msra.mxu0 %v988
      %1028 = vmatprep.subr.bf16.mxu0 %v987
      %1029 = vmatpush1.bf16.msra.mxu0 %v986
      %1030 = vmatprep.subr.bf16.mxu0 %v985
      %1031 = vmatpush1.bf16.msra.mxu0 %v984
      %1032 = vmatprep.subr.bf16.mxu0 %v983
      %1033 = vmatpush1.bf16.msra.mxu0 %v982
      %1034 = vmatprep.subr.bf16.mxu0 0
      %1035 = vmatpush2.bf16.msra.mxu0 0
      %1036 = vmatprep.subr.bf16.mxu0 0
      %1037 = vmatpush2.bf16.msra.mxu0 0
      %1038 = vmatprep.subr.bf16.mxu0 0
      %1039 = vmatpush2.bf16.msra.mxu0 0
      %1040 = vmatprep.subr.bf16.mxu0 0
      %1041 = vmatpush2.bf16.msra.mxu0 0
      %1042 = vmatprep.subr.bf16.mxu0 0
      %1043 = vmatpush2.bf16.msra.mxu0 0
      %1044 = vmatprep.subr.bf16.mxu0 0
      %1045 = vmatpush2.bf16.msra.mxu0 0
      %1046 = vmatprep.subr.bf16.mxu0 0
      %1047 = vmatpush2.bf16.msra.mxu0 0
      %1048 = vmatprep.subr.bf16.mxu0 %v999
      %1049 = vmatpush2.bf16.msra.mxu0 %v998
      %1050 = vmatprep.mubr.bf16.mxu0 %v614
      %1051 = vmatmul.mubr.bf16.gmra.mxu0 %v519
      %v1052 = vpop.f32.mrf.mxu0
      %v1053 = vadd.f32 %v514, %v1052
      %v1054 = vpop.f32.mrf.mxu0
      %v1055 = vadd.f32 %v514, %v1054
      %v1056 = vpop.f32.mrf.mxu0
      %v1057 = vpop.f32.mrf.mxu0
      %1058 = vdwg.mxu0
      %1059 = vst [vmem:[%s251 + $0x10] sm:$0xff] %v1053
      %1060 = vst [vmem:[%s251 + $0x18] sm:$0xff] %v1055
      %v1061 = vmul.f32 %v1053, %v663
      %v1062 = vmul.f32 %v1055, %v667
      %v1063 = vadd.f32 %v1061, %v1062
      %1064 = vadd.xlane.f32.xlu0 %v1063
      %v1065 = vpop.xlane.xlu0 %1064
      %v1066 = vadd.f32 %v675, %v1065
      %v1067 = vmul.f32 %v1061, %v1053
      %v1068 = vmul.f32 %v1062, %v1055
      %v1069 = vadd.f32 %v1067, %v1068
      %1070 = vadd.xlane.f32.xlu0 %v1069
      %v1071 = vpop.xlane.xlu0 %1070
      %v1072 = vadd.f32 %v681, %v1071
      %v1073 = vmul.f32 %v1066, 0.00390625
      %v1074 = vmul.f32 %v1072, 0.00390625
      %v1075 = vmul.f32 %v1073, %v1073
      %v1076 = vsub.f32 %v1074, %v1075
      %v1077 = vmax.f32 %v1076, 0.0
      %v1078 = vld [vmem:[%s3] sm:$0xff]
      %v1079 = vadd.f32 %v1077, 1e-05
      %v1080 = vrsqrt.pop %v1079
      %v1081 = vmul.f32 %v1078, %v1080
      %v1082 = vld [vmem:[%s4] sm:$0xff]
      %v1083 = vmul.f32 %v1073, %v1081
      %v1084 = vsub.f32 %v1082, %v1083
      %v1085 = vld [vmem:[%s251] sm:$0xff]
      %v1086 = vld [vmem:[%s251 + $0x8] sm:$0xff]
      %1088 = vset.pattern.permute.xlu0 0
      %1089 = vperm.xlu0 %1088, %v1081
      %v1090 = vpop.permute.xlu0 %1089
      %v1092 = vmul.f32 %v1085, %v1090
      %v1093 = vmul.f32 %v1086, %v1090
      %1095 = vset.pattern.permute.xlu0 0
      %1096 = vperm.xlu0 %1095, %v1084
      %v1097 = vpop.permute.xlu0 %1096
      %v1099 = vadd.f32 %v1092, %v1097
      %v1100 = vadd.f32 %v1093, %v1097
      %v1101 = vmax.f32 %v1099, 0.0
      %v1102 = vmax.f32 %v1100, 0.0
      %1103 = vst [vmem:[%s251] sm:$0xff] %v1101
      %1104 = vst [vmem:[%s251 + $0x8] sm:$0xff] %v1102
      %v1105 = vld [vmem:[%s251 + $0x10] sm:$0xff]
      %v1106 = vld [vmem:[%s251 + $0x18] sm:$0xff]
      %v1107 = vmul.f32 %v1105, %v1090
      %v1108 = vmul.f32 %v1106, %v1090
      %v1109 = vadd.f32 %v1107, %v1097
      %v1110 = vadd.f32 %v1108, %v1097
      %v1111 = vmax.f32 %v1109, 0.0
      %v1112 = vmax.f32 %v1110, 0.0
      %1113 = vst [vmem:[%s251 + $0x10] sm:$0xff] %v1111
      %1114 = vst [vmem:[%s251 + $0x18] sm:$0xff] %v1112
      %p1115 = scmp.lt.s32.totalorder %s17, 1
      %s1116 = scalar_select %p1115, %s17, 1
      %s1117 = smul.addr %s1116, 4
      %s1118 = smul.addr %s1117, 8
      %s1119 = scalar_lea.vmem %s6, %s1118
      // Predicated region
      $region45: #{conv_block.1} parent=43 // pred_check
        %p1120 = pneg %p166
      $region46: #{conv_block.1} parent=43 // pred_check_branch
        %1122 = sbr.rel (%p1120) target = $region48
      $region47: #{conv_block.1} parent=43 // pred_region
        _
      $region48: #{conv_block.1} parent=43 // pred_fallthru
        _
    $region44: #{conv_block.1} parent=5 // pred_fallthru
      _
    %p1123 = scmp.le.s32.totalorder 2, %s12
    // Predicated region
    $region49: #{conv_block.1} parent=5 // pred_check
      %p1124 = pneg %p1123
    $region50: #{conv_block.1} parent=5 // pred_check_branch
      %1126 = sbr.rel (%p1124) target = $region52
    $region51: #{conv_block.1} parent=5 // pred_region
      %s1127 = ssub.s32 %s12, 2
      // Predicated region
      $region53: #{conv_block.1} parent=51 // pred_check
        %p1128 = pneg %p172
      $region54: #{conv_block.1} parent=51 // pred_check_branch
        %1130 = sbr.rel (%p1128) target = $region56
      $region55: #{conv_block.1} parent=51 // pred_region
        %p1131 = scmp.lt.s32.totalorder %s18, 1
        %s1132 = scalar_select %p1131, %s18, 1
        %s1133 = smul.addr %s1132, 4
        %s1134 = smul.addr %s1133, 8
        %s1135 = scalar_lea.vmem %s6, %s1134
      $region56: #{conv_block.1} parent=51 // pred_fallthru
        _
    $region52: #{conv_block.1} parent=5 // pred_fallthru
      _
  $region6: #{conv_block.1} parent=0 // loop_footer
    %s16 = sadd.s32 1, %s12
  $region7: #{conv_block.1} parent=0 // loop_footer_branch
    %11 = sbr.rel target = $region3
  $region8: #{conv_block.1} parent=0 // loop_exit
    _

</llo_original>
